<compile_context>
chip_gen: v7x
topology: tpu7x:2x2x1
jax: 0.10.0
libtpu: 0.0.40
codegen_flags: <defaults>
</compile_context>

<pallas_src>
import functools

import jax
import jax.numpy as jnp
from jax import lax
from jax.experimental import pallas as pl
from jax.experimental.pallas import tpu as pltpu

_F32_TINY = float(jnp.finfo(jnp.float32).tiny)
_MAX_TD = 4096      # lane-axis chunk cap (multiple of 128)
_MAX_TM = 8192      # sublane-axis cap (bounds per-column temporaries)


def _round_up(x: int, m: int) -> int:
    return ((x + m - 1) // m) * m


@functools.lru_cache(maxsize=1)
def _hw_params():
    """Generation-aware tiling knobs. Falls back to conservative (v7x-like)."""
    vmem_cap = 64 * 1024 * 1024
    try:
        info_fn = getattr(pltpu, "get_tpu_info", None)
        if info_fn is not None:
            vmem_cap = int(info_fn().vmem_capacity_bytes)
    except Exception:
        pass
    big_vmem = vmem_cap >= 96 * 1024 * 1024      # v5e / v6e (128 MiB)
    target_block_bytes = (8 if big_vmem else 4) * 1024 * 1024
    min_row_blocks = 1 if big_vmem else 4        # v7x: feed both TensorCores
    vmem_limit = max(32 * 1024 * 1024, (vmem_cap * 3) // 4)
    return target_block_bytes, min_row_blocks, vmem_limit


def _make_jsd_kernel(D: int, td: int, tm: int):
    ncols = td // 128
    has_tail = (D % td) != 0

    def kernel(p_ref, q_ref, o_ref, acc_ref):
        k = pl.program_id(1)
        nk = pl.num_programs(1)

        @pl.when(k == 0)
        def _():
            acc_ref[...] = jnp.zeros_like(acc_ref)

        def col_term(c):
            lo = c * 128
            p = p_ref[:, lo:lo + 128].astype(jnp.float32)
            q = q_ref[:, lo:lo + 128].astype(jnp.float32)
            s = p + q
            # m = nan_to_num(log(0.5*(p+q))) of the reference: for valid
            # probabilities only the s==0 branch is reachable and there
            # s*m == 0, so the clamp form is exact (and underflow-safe).
            m = jnp.log(jnp.maximum(0.5 * s, _F32_TINY))
            # KLDivLoss(reduction='none', log_target=False)(m, t)
            #   = xlogy(t, t) - t*m ; xlogy via clamp: 0*log(tiny) == 0.
            return (p * jnp.log(jnp.maximum(p, _F32_TINY))
                    + q * jnp.log(jnp.maximum(q, _F32_TINY))
                    - s * m)

        def fold(valid_lanes=None):
            if valid_lanes is None:
                partial = col_term(0)
                for c in range(1, ncols):
                    partial = partial + col_term(c)
            else:
                lane = lax.broadcasted_iota(jnp.int32, (tm, 128), 1)
                partial = jnp.zeros((tm, 128), jnp.float32)
                for c in range(ncols):
                    t = col_term(c)
                    t = jnp.where(lane < (valid_lanes - c * 128), t, 0.0)
                    partial = partial + t
            acc_ref[...] += partial

        if has_tail:
            # Full interior D-blocks: no masking cost.
            @pl.when(k < nk - 1)
            def _():
                fold()

            # Tail D-block: out-of-bounds lanes hold unspecified data and MUST
            # be masked out of the row sums.
            @pl.when(k == nk - 1)
            def _():
                fold(valid_lanes=D - k * td)
        else:
            fold()

        @pl.when(k == nk - 1)
        def _():
            o_ref[...] = (
                0.5 * acc_ref[...].sum(axis=-1, keepdims=True)
            ).astype(o_ref.dtype)

    return kernel


@jax.jit
def jsd(p, q):
    assert p.shape == q.shape, "p and q must have the same shape"
    orig_shape = p.shape
    D = orig_shape[-1]
    M = 1
    for s in orig_shape[:-1]:
        M *= s

    out_dtype = jnp.result_type(p.dtype, q.dtype)
    p2 = p.reshape(M, D)
    q2 = q.reshape(M, D)

    target_block_bytes, min_row_blocks, vmem_limit = _hw_params()
    itemsize = max(jnp.dtype(p.dtype).itemsize, jnp.dtype(q.dtype).itemsize)

    # --- choose tiles (no input padding; Pallas takes partial tail blocks) ---
    td = min(_round_up(D, 128), _MAX_TD)
    tm = max(8, (target_block_bytes // (td * itemsize)) // 8 * 8)
    tm = min(tm, _MAX_TM)
    # Don't make row blocks larger than needed for the row-parallel axis.
    tm = min(tm, max(8, _round_up(pl.cdiv(M, min_row_blocks), 8)))

    grid = (pl.cdiv(M, tm), pl.cdiv(D, td))

    out = pl.pallas_call(
        _make_jsd_kernel(D, td, tm),
        out_shape=jax.ShapeDtypeStruct((M, 1), out_dtype),
        grid_spec=pltpu.PrefetchScalarGridSpec(
            num_scalar_prefetch=0,
            grid=grid,
            in_specs=[
                pl.BlockSpec((tm, td), lambda i, k: (i, k)),
                pl.BlockSpec((tm, td), lambda i, k: (i, k)),
            ],
            out_specs=pl.BlockSpec((tm, 1), lambda i, k: (i, 0)),
            scratch_shapes=[pltpu.VMEM((tm, 128), jnp.float32)],
        ),
        compiler_params=pltpu.CompilerParams(
            dimension_semantics=("parallel", "arbitrary"),
            vmem_limit_bytes=int(vmem_limit),
        ),
    )(p2, q2)

    return out.reshape(orig_shape[:-1] + (1,))


def _jsd_ref(p, q):
    """Pure-JAX reference mirroring the PyTorch module (f32 accumulation)."""
    p = p.astype(jnp.float32)
    q = q.astype(jnp.float32)
    m = jnp.nan_to_num(jnp.log(0.5 * (p + q)))
    xlogy_p = jnp.where(p > 0, p * jnp.log(p), 0.0)
    xlogy_q = jnp.where(q > 0, q * jnp.log(q), 0.0)
    kl_p_m = (xlogy_p - p * m).sum(axis=-1, keepdims=True)
    kl_q_m = (xlogy_q - q * m).sum(axis=-1, keepdims=True)
    return 0.5 * (kl_p_m + kl_q_m)


if __name__ == "__main__":
    key = jax.random.PRNGKey(0)
    k1, k2, k3, k4 = jax.random.split(key, 4)

    # Case 1: lane-aligned small shape (batch=2, seq=8, dist dim=128).
    shape1 = (2, 8, 128)
    p1 = jax.nn.softmax(jax.random.normal(k1, shape1, dtype=jnp.float32), -1)
    q1 = jax.nn.softmax(jax.random.normal(k2, shape1, dtype=jnp.float32), -1)
    out1 = jax.block_until_ready(jsd(p1, q1))
    ref1 = _jsd_ref(p1, q1)
    assert out1.shape == shape1[:-1] + (1,)
    assert jnp.allclose(out1, ref1, atol=1e-5, rtol=1e-5), (out1, ref1)

    # Case 2: unaligned shape exercising the in-kernel tail-lane masking and
    # the partial M-tail block (no jnp.pad anywhere).
    shape2 = (3, 5, 100)
    p2 = jax.nn.softmax(jax.random.normal(k3, shape2, dtype=jnp.float32), -1)
    q2 = jax.nn.softmax(jax.random.normal(k4, shape2, dtype=jnp.float32), -1)
    out2 = jax.block_until_ready(jsd(p2, q2))
    ref2 = _jsd_ref(p2, q2)
    assert out2.shape == shape2[:-1] + (1,)
    assert jnp.allclose(out2, ref2, atol=1e-5, rtol=1e-5), (out2, ref2)

    print("KERNEL_OK")
</pallas_src>

<mosaic_0001>
module attributes {stable_mosaic.version = 11 : i64} {
  func.func @kernel(%arg0: i32, %arg1: i32, %arg2: memref<8x128xf32, #tpu.memory_space<vmem>>, %arg3: memref<8x128xf32, #tpu.memory_space<vmem>>, %arg4: memref<8x1xf32, #tpu.memory_space<vmem>>, %arg5: memref<8x128xf32, #tpu.memory_space<vmem>>) attributes {dimension_semantics = [#tpu.dimension_semantics<parallel>, #tpu.dimension_semantics<arbitrary>], iteration_bounds = array<i64: 2, 1>, scalar_prefetch = 0 : i64, scratch_operands = 1 : i64, tpu.core_type = #tpu.core_type<tc>, window_params = [{transform_indices = @transform_0, window_bounds = array<i64: 8, 128>}, {transform_indices = @transform_1, window_bounds = array<i64: 8, 128>}, {transform_indices = @transform_2, window_bounds = array<i64: 8, 1>}]} {
    %c0_i32 = arith.constant 0 : i32
    %0 = arith.cmpi eq, %arg1, %c0_i32 : i32
    %1 = arith.extui %0 : i1 to i32
    %c0_i32_0 = arith.constant 0 : i32
    %2 = arith.cmpi ne, %1, %c0_i32_0 : i32
    scf.if %2 {
      %cst_13 = arith.constant 0.000000e+00 : f32
      %28 = vector.broadcast %cst_13 : f32 to vector<8x128xf32>
      %c0_14 = arith.constant 0 : index
      %c0_15 = arith.constant 0 : index
      %29 = vector.load %arg5[%c0_14, %c0_15] : memref<8x128xf32, #tpu.memory_space<vmem>>, vector<8x128xf32>
      tpu.vector_store %arg5[%c0_14, %c0_15], %28 {strides = array<i32>} : memref<8x128xf32, #tpu.memory_space<vmem>>, vector<8x128xf32>,
    } else {
    }
    %c0 = arith.constant 0 : index
    %c0_1 = arith.constant 0 : index
    %3 = vector.load %arg2[%c0, %c0_1] : memref<8x128xf32, #tpu.memory_space<vmem>>, vector<8x128xf32>
    %c0_2 = arith.constant 0 : index
    %c0_3 = arith.constant 0 : index
    %4 = vector.load %arg3[%c0_2, %c0_3] : memref<8x128xf32, #tpu.memory_space<vmem>>, vector<8x128xf32>
    %5 = arith.addf %3, %4 : vector<8x128xf32>
    %cst = arith.constant 5.000000e-01 : f32
    %6 = vector.broadcast %cst : f32 to vector<8x128xf32>
    %7 = arith.mulf %6, %5 : vector<8x128xf32>
    %cst_4 = arith.constant 1.17549435E-38 : f32
    %8 = vector.broadcast %cst_4 : f32 to vector<8x128xf32>
    %9 = arith.maximumf %7, %8 : vector<8x128xf32>
    %10 = math.log %9 : vector<8x128xf32>
    %cst_5 = arith.constant 1.17549435E-38 : f32
    %11 = vector.broadcast %cst_5 : f32 to vector<8x128xf32>
    %12 = arith.maximumf %3, %11 : vector<8x128xf32>
    %13 = math.log %12 : vector<8x128xf32>
    %14 = arith.mulf %3, %13 : vector<8x128xf32>
    %cst_6 = arith.constant 1.17549435E-38 : f32
    %15 = vector.broadcast %cst_6 : f32 to vector<8x128xf32>
    %16 = arith.maximumf %4, %15 : vector<8x128xf32>
    %17 = math.log %16 : vector<8x128xf32>
    %18 = arith.mulf %4, %17 : vector<8x128xf32>
    %19 = arith.addf %14, %18 : vector<8x128xf32>
    %20 = arith.mulf %5, %10 : vector<8x128xf32>
    %21 = arith.subf %19, %20 : vector<8x128xf32>
    %c0_7 = arith.constant 0 : index
    %c0_8 = arith.constant 0 : index
    %22 = vector.load %arg5[%c0_7, %c0_8] : memref<8x128xf32, #tpu.memory_space<vmem>>, vector<8x128xf32>
    %23 = arith.addf %22, %21 : vector<8x128xf32>
    %c0_9 = arith.constant 0 : index
    %c0_10 = arith.constant 0 : index
    %24 = vector.load %arg5[%c0_9, %c0_10] : memref<8x128xf32, #tpu.memory_space<vmem>>, vector<8x128xf32>
    tpu.vector_store %arg5[%c0_9, %c0_10], %23 {strides = array<i32>} : memref<8x128xf32, #tpu.memory_space<vmem>>, vector<8x128xf32>,
    %c0_i32_11 = arith.constant 0 : i32
    %25 = arith.cmpi eq, %arg1, %c0_i32_11 : i32
    %26 = arith.extui %25 : i1 to i32
    %c0_i32_12 = arith.constant 0 : i32
    %27 = arith.cmpi ne, %26, %c0_i32_12 : i32
    scf.if %27 {
      %c0_13 = arith.constant 0 : index
      %c0_14 = arith.constant 0 : index
      %28 = vector.load %arg5[%c0_13, %c0_14] : memref<8x128xf32, #tpu.memory_space<vmem>>, vector<8x128xf32>
      %cst_15 = arith.constant dense<0.000000e+00> : vector<8xf32>
      %29 = vector.multi_reduction <add>, %28, %cst_15 [1] : vector<8x128xf32> to vector<8xf32>
      %30 = vector.shape_cast %29 : vector<8xf32> to vector<8x1xf32>
      %cst_16 = arith.constant 5.000000e-01 : f32
      %31 = vector.broadcast %cst_16 : f32 to vector<8x1xf32>
      %32 = arith.mulf %31, %30 : vector<8x1xf32>
      %c0_17 = arith.constant 0 : index
      %c0_18 = arith.constant 0 : index
      %33 = vector.load %arg4[%c0_17, %c0_18] : memref<8x1xf32, #tpu.memory_space<vmem>>, vector<8x1xf32>
      tpu.vector_store %arg4[%c0_17, %c0_18], %32 {strides = array<i32>} : memref<8x1xf32, #tpu.memory_space<vmem>>, vector<8x1xf32>,
    } else {
    }
    return
  }
  func.func @transform_0(%arg0: i32, %arg1: i32) -> (i32, i32) {
    %c0_i32 = arith.constant 0 : i32
    return %arg0, %arg1 : i32, i32
  }
  func.func @transform_1(%arg0: i32, %arg1: i32) -> (i32, i32) {
    %c0_i32 = arith.constant 0 : i32
    return %arg0, %arg1 : i32, i32
  }
  func.func @transform_2(%arg0: i32, %arg1: i32) -> (i32, i32) {
    %c0_i32 = arith.constant 0 : i32
    %c0_i32_0 = arith.constant 0 : i32
    return %arg0, %c0_i32 : i32, i32
  }
}

</mosaic_0001>

<llo_original>
// kernel: jsd.1
$region0: #{jsd.1}
  #allocation0 [shape = 'u32[]', space=smem, size = 0x4, offset = 0x4, fixed_abs, tag = 'smem constant byte address 0x4 - core index']
  #allocation1 [shape = 'u32[144,128]{1,0:T(1,128)}', space=vmem, size = 0x12000, scoped, tag = 'internal scratch']
  #allocation2 [shape = 'f32[8,128]{1,0:T(8,128)}', space=vmem, size = 0x1000, scoped, tag = 'scratch operand']
  %s0 = inlined_call_operand.hbm [shape: f32[16,128], index: 0, kind: input, shape index: {}]
  %s1 = inlined_call_operand.hbm [shape: f32[16,128], index: 1, kind: input, shape index: {}]
  %s2 = inlined_call_operand.vmem [shape: f32[16,1], index: 2, kind: output, shape index: {}]
  %s3 = sld [smem:[#allocation0]]
  $region57: #{jsd.1} parent=0
    _
  %s5 = ssub.s32 1, %s3
  %s6 = scalar_select 0, %s5, %s3
  $region1: #{jsd.1} parent=0
    #allocation3 [shape = 'u8[8192]{0}', space=vmem, size = 0x2000, scoped, tag = 'input window, operand 0']
    #allocation4 [shape = 's32[2]{0}', space=sflag, size = 0x8, scoped, tag = 'scoped memory for jsd.1']
    #allocation5 [shape = 'u8[8192]{0}', space=vmem, size = 0x2000, scoped, tag = 'input window, operand 1']
    #allocation6 [shape = 's32[2]{0}', space=sflag, size = 0x8, scoped, tag = 'scoped memory for jsd.1']
    %7 = vsyncpa [#allocation4], 0
    %s8 = scalar_lea.sflag [#allocation4], 1
    %9 = vsyncpa %s8, 0
    %10 = vsyncpa [#allocation6], 0
    %s11 = scalar_lea.sflag [#allocation6], 1
    %12 = vsyncpa %s11, 0
    loop: start=0, step=1, limit=4
    $region2: #{jsd.1} parent=1 // loop_pre_header
      _
    $region3: #{jsd.1} parent=1 // loop_header
      %s14 = sphi 0, %s18
      %p15 = scmp.ge.s32.totalorder %s14, 4
      %s21 = sphi 0, %s33
      %s22 = sphi 0, %s29
      %s23 = sphi 0, %s21
      %s24 = sphi 0, %s22
      %s25 = sphi 0, %s23
      %s26 = sphi 0, %s24
      %s38 = sphi 0, %s40
      %s41 = sphi 0, %s38
      %s42 = sphi 0, %s41
      %s58 = sphi 0, %s42
      %s66 = sphi 0, %s68
      %s69 = sphi 0, %s66
      %s70 = sphi 0, %s69
      %s86 = sphi 0, %s70
      %s92 = sphi 0, %s94
      %s95 = sphi 0, %s92
      %s96 = sphi 0, %s95
      %s112 = sphi 0, %s96
    $region4: #{jsd.1} parent=1 // loop_header_branch
      %17 = sbr.rel (%p15) target = $region8
    $region5: #{jsd.1} parent=1 // loop_body
      %s19 = ssub.s32 %s14, 1
      %s20 = ssub.s32 %s14, 2
      %s27 = sadd.s32 1, %s22
      %p28 = scmp.ge.s32.totalorder %s27, 1
      %s29 = scalar_select %p28, 0, %s27
      %s30 = sadd.s32 1, %s21
      %s31 = scalar_select %p28, %s30, %s21
      %p32 = scmp.ge.s32.totalorder %s31, 2
      %s33 = scalar_select %p32, 0, %s31
      %s34 = ssub.s32 %s21, %s33
      %s35 = ssub.s32 %s22, %s29
      %s36 = sor.u32 %s34, %s35
      %p37 = scmp.eq.s32.totalorder %s36, 0
      %s39 = sadd.s32 %s38, 1
      %s40 = scalar_select %p37, %s38, %s39
      %p43 = pneg %p37
      %p44 = scmp.eq.s32.totalorder %s14, 1
      %p45 = por %p43, %p44
      %p46 = scmp.ne.s32.totalorder %s38, %s41
      %p47 = scmp.eq.s32.totalorder %s14, 0
      %p48 = por %p46, %p47
      %p49 = scmp.ne.s32.totalorder %s38, %s41
      %p50 = scmp.eq.s32.totalorder %s19, 1
      %p51 = por %p49, %p50
      %p52 = scmp.ne.s32.totalorder %s41, %s42
      %p53 = scmp.eq.s32.totalorder %s19, 0
      %p54 = por %p52, %p53
      %p55 = scmp.ne.s32.totalorder %s41, %s42
      %p56 = scmp.eq.s32.totalorder %s20, 1
      %p57 = por %p55, %p56
      %p59 = scmp.ne.s32.totalorder %s42, %s58
      %p60 = scmp.eq.s32.totalorder %s20, 0
      %p61 = por %p59, %p60
      %s62 = ssub.s32 %s21, %s33
      %s63 = ssub.s32 %s22, %s29
      %s64 = sor.u32 %s62, %s63
      %p65 = scmp.eq.s32.totalorder %s64, 0
      %s67 = sadd.s32 %s66, 1
      %s68 = scalar_select %p65, %s66, %s67
      %p71 = pneg %p65
      %p72 = scmp.eq.s32.totalorder %s14, 1
      %p73 = por %p71, %p72
      %p74 = scmp.ne.s32.totalorder %s66, %s69
      %p75 = scmp.eq.s32.totalorder %s14, 0
      %p76 = por %p74, %p75
      %p77 = scmp.ne.s32.totalorder %s66, %s69
      %p78 = scmp.eq.s32.totalorder %s19, 1
      %p79 = por %p77, %p78
      %p80 = scmp.ne.s32.totalorder %s69, %s70
      %p81 = scmp.eq.s32.totalorder %s19, 0
      %p82 = por %p80, %p81
      %p83 = scmp.ne.s32.totalorder %s69, %s70
      %p84 = scmp.eq.s32.totalorder %s20, 1
      %p85 = por %p83, %p84
      %p87 = scmp.ne.s32.totalorder %s70, %s86
      %p88 = scmp.eq.s32.totalorder %s20, 0
      %p89 = por %p87, %p88
      %s90 = ssub.s32 %s21, %s33
      %p91 = scmp.eq.s32.totalorder %s90, 0
      %s93 = sadd.s32 %s92, 1
      %s94 = scalar_select %p91, %s92, %s93
      %p97 = pneg %p91
      %p98 = scmp.eq.s32.totalorder %s14, 1
      %p99 = por %p97, %p98
      %p100 = scmp.ne.s32.totalorder %s92, %s95
      %p101 = scmp.eq.s32.totalorder %s14, 0
      %p102 = por %p100, %p101
      %p103 = scmp.ne.s32.totalorder %s92, %s95
      %p104 = scmp.eq.s32.totalorder %s19, 1
      %p105 = por %p103, %p104
      %p106 = scmp.ne.s32.totalorder %s95, %s96
      %p107 = scmp.eq.s32.totalorder %s19, 0
      %p108 = por %p106, %p107
      %p109 = scmp.ne.s32.totalorder %s95, %s96
      %p110 = scmp.eq.s32.totalorder %s20, 1
      %p111 = por %p109, %p110
      %p113 = scmp.ne.s32.totalorder %s96, %s112
      %p114 = scmp.eq.s32.totalorder %s20, 0
      %p115 = por %p113, %p114
      %p116 = scmp.le.s32.totalorder 1, %s14
      %p117 = scmp.lt.s32.totalorder %s14, 3
      %p118 = pnand %p116, %p117
      %p119 = pneg %p118
      // Predicated region
      $region9: #{jsd.1} parent=5 // pred_check
        _
      $region10: #{jsd.1} parent=5 // pred_check_branch
        %121 = sbr.rel (%p118) target = $region12
      $region11: #{jsd.1} parent=5 // pred_region
        %s122 = ssub.s32 %s14, 1
      $region12: #{jsd.1} parent=5 // pred_fallthru
        _
      %p123 = scmp.lt.s32.totalorder %s14, 2
      // Predicated region
      $region13: #{jsd.1} parent=5 // pred_check
        %p124 = pneg %p123
      $region14: #{jsd.1} parent=5 // pred_check_branch
        %126 = sbr.rel (%p124) target = $region16
      $region15: #{jsd.1} parent=5 // pred_region
        // Predicated region
        $region17: #{jsd.1} parent=15 // pred_check
          %p127 = pneg %p48
        $region18: #{jsd.1} parent=15 // pred_check_branch
          %129 = sbr.rel (%p127) target = $region20
        $region19: #{jsd.1} parent=15 // pred_region
          %s130 = sand.u32 %s38, 1
          %s131 = scalar_lea.sflag [#allocation4], %s130
          %s132 = sand.u32 %s38, 1
          %s133 = smul.addr %s132, 8
          %s134 = scalar_lea.vmem [#allocation3], %s133
          %s136 = ssub.s32 128, 128
          %137 = vsyncadd %s131, %s136
          %s138 = sadd.s32 %s22, %s21
          %s139 = smul.addr %s138, 128
          %s140 = scalar_lea.hbm %s0, %s139
          %s142 = sshll.u32 %s134, 4
          %s143 = int_to_ptr.vmem [resolvable:$true] %s142
          %145 = dma.hbm_to_vmem [thread:$0]  %s140, 128, %s143, %s131
        $region20: #{jsd.1} parent=15 // pred_fallthru
          _
        // Predicated region
        $region21: #{jsd.1} parent=15 // pred_check
          %p146 = pneg %p76
        $region22: #{jsd.1} parent=15 // pred_check_branch
          %148 = sbr.rel (%p146) target = $region24
        $region23: #{jsd.1} parent=15 // pred_region
          %s149 = sand.u32 %s66, 1
          %s150 = scalar_lea.sflag [#allocation6], %s149
          %s151 = sand.u32 %s66, 1
          %s152 = smul.addr %s151, 8
          %s153 = scalar_lea.vmem [#allocation5], %s152
          %s155 = ssub.s32 128, 128
          %156 = vsyncadd %s150, %s155
          %s157 = sadd.s32 %s22, %s21
          %s158 = smul.addr %s157, 128
          %s159 = scalar_lea.hbm %s1, %s158
          %s161 = sshll.u32 %s153, 4
          %s162 = int_to_ptr.vmem [resolvable:$true] %s161
          %164 = dma.hbm_to_vmem [thread:$0]  %s159, 128, %s162, %s150
        $region24: #{jsd.1} parent=15 // pred_fallthru
          _
      $region16: #{jsd.1} parent=5 // pred_fallthru
        _
      %p165 = scmp.le.s32.totalorder 1, %s14
      %p166 = scmp.lt.s32.totalorder %s14, 3
      %p167 = pnand %p165, %p166
      %p168 = pneg %p167
      // Predicated region
      $region25: #{jsd.1} parent=5 // pred_check
        _
      $region26: #{jsd.1} parent=5 // pred_check_branch
        %170 = sbr.rel (%p167) target = $region28
      $region27: #{jsd.1} parent=5 // pred_region
        %s171 = ssub.s32 %s14, 1
        %s172 = sand.u32 %s41, 1
        %s173 = scalar_lea.sflag [#allocation4], %s172
        %s174 = sand.u32 %s41, 1
        %s175 = smul.addr %s174, 8
        %s176 = scalar_lea.vmem [#allocation3], %s175
        // Predicated region
        $region29: #{jsd.1} parent=27 // pred_check
          %p177 = pneg %p54
        $region30: #{jsd.1} parent=27 // pred_check_branch
          %179 = sbr.rel (%p177) target = $region32
        $region31: #{jsd.1} parent=27 // pred_region
          %180 = dma.done %s173, 128
        $region32: #{jsd.1} parent=27 // pred_fallthru
          _
        %s181 = sand.u32 %s69, 1
        %s182 = scalar_lea.sflag [#allocation6], %s181
        %s183 = sand.u32 %s69, 1
        %s184 = smul.addr %s183, 8
        %s185 = scalar_lea.vmem [#allocation5], %s184
        // Predicated region
        $region33: #{jsd.1} parent=27 // pred_check
          %p186 = pneg %p82
        $region34: #{jsd.1} parent=27 // pred_check_branch
          %188 = sbr.rel (%p186) target = $region36
        $region35: #{jsd.1} parent=27 // pred_region
          %189 = dma.done %s182, 128
        $region36: #{jsd.1} parent=27 // pred_fallthru
          _
        %s190 = sand.u32 %s41, 1
        %s191 = scalar_lea.sflag [#allocation4], %s190
        %s192 = sand.u32 %s41, 1
        %s193 = smul.addr %s192, 8
        %s194 = scalar_lea.vmem [#allocation3], %s193
        %p195 = pneg %p54
        %p196 = pneg %p51
        %s197 = sand.u32 %s69, 1
        %s198 = scalar_lea.sflag [#allocation6], %s197
        %s199 = sand.u32 %s69, 1
        %s200 = smul.addr %s199, 8
        %s201 = scalar_lea.vmem [#allocation5], %s200
        %p202 = pneg %p82
        %p203 = pneg %p79
        %p204 = pneg %p108
        %p205 = pneg %p105
        %p206 = scmp.lt.s32.totalorder %s23, 1
        %s207 = scalar_select %p206, %s23, 1
        %s208 = smul.addr %s207, 8
        %s209 = scalar_lea.vmem %s2, %s208
        %p210 = scmp.lt.s32.totalorder %s23, 1
        %s211 = scalar_select %p210, %s23, 1
        %s212 = smul.addr %s211, 8
        %s213 = scalar_lea.vmem %s2, %s212
        %p214 = scmp.eq.s32.totalorder %s24, 0
        // Predicated region
        $region37: #{jsd.1} parent=27 // pred_check
          %p215 = pneg %p214
        $region38: #{jsd.1} parent=27 // pred_check_branch
          %217 = sbr.rel (%p215) target = $region40
        $region39: #{jsd.1} parent=27 // pred_region
          %218 = vst [vmem:[#allocation2] sm:$0xff] 0.0
        $region40: #{jsd.1} parent=27 // pred_fallthru
          _
        %v219 = vld [vmem:[%s176] sm:$0xff]
        %v220 = vld [vmem:[%s185] sm:$0xff]
        %v221 = vadd.f32 %v219, %v220
        %v222 = vmul.f32 %v221, 0.5
        %v223 = vmax.f32 %v222, 1.1754944e-38
        %v224 = vlog2.pop %v223
        %v225 = vmul.f32 %v224, 0.6931472
        %v226 = vmax.f32 %v219, 1.1754944e-38
        %v227 = vlog2.pop %v226
        %v228 = vmul.f32 %v227, 0.6931472
        %v229 = vmul.f32 %v219, %v228
        %v230 = vmax.f32 %v220, 1.1754944e-38
        %v231 = vlog2.pop %v230
        %v232 = vmul.f32 %v231, 0.6931472
        %v233 = vmul.f32 %v220, %v232
        %v234 = vadd.f32 %v229, %v233
        %v235 = vmul.f32 %v221, %v225
        %v236 = vsub.f32 %v234, %v235
        %v237 = vld [vmem:[#allocation2] sm:$0xff]
        %v238 = vadd.f32 %v237, %v236
        %239 = vst [vmem:[#allocation2] sm:$0xff] %v238
        // Predicated region
        $region41: #{jsd.1} parent=27 // pred_check
          %p240 = pneg %p214
        $region42: #{jsd.1} parent=27 // pred_check_branch
          %242 = sbr.rel (%p240) target = $region44
        $region43: #{jsd.1} parent=27 // pred_region
          %v243 = vld [vmem:[#allocation2] sm:$0xff]
          %244 = vadd.xlane.f32.xlu0 %v243
          %v245 = vpop.xlane.xlu0 %244
          %v246 = vmul.f32 %v245, 0.5
          %vm247 = vcmask 7168
          %248 = vst.msk [vmem:[%s213] sm:$0xff] %vm247, %v246
        $region44: #{jsd.1} parent=27 // pred_fallthru
          _
        %p249 = scmp.lt.s32.totalorder %s23, 1
        %s250 = scalar_select %p249, %s23, 1
        %s251 = smul.addr %s250, 8
        %s252 = scalar_lea.vmem %s2, %s251
        // Predicated region
        $region45: #{jsd.1} parent=27 // pred_check
          %p253 = pneg %p105
        $region46: #{jsd.1} parent=27 // pred_check_branch
          %255 = sbr.rel (%p253) target = $region48
        $region47: #{jsd.1} parent=27 // pred_region
          _
        $region48: #{jsd.1} parent=27 // pred_fallthru
          _
      $region28: #{jsd.1} parent=5 // pred_fallthru
        _
      %p256 = scmp.le.s32.totalorder 2, %s14
      // Predicated region
      $region49: #{jsd.1} parent=5 // pred_check
        %p257 = pneg %p256
      $region50: #{jsd.1} parent=5 // pred_check_branch
        %259 = sbr.rel (%p257) target = $region52
      $region51: #{jsd.1} parent=5 // pred_region
        %s260 = ssub.s32 %s14, 2
        // Predicated region
        $region53: #{jsd.1} parent=51 // pred_check
          %p261 = pneg %p111
        $region54: #{jsd.1} parent=51 // pred_check_branch
          %263 = sbr.rel (%p261) target = $region56
        $region55: #{jsd.1} parent=51 // pred_region
          %p264 = scmp.lt.s32.totalorder %s25, 1
          %s265 = scalar_select %p264, %s25, 1
          %s266 = smul.addr %s265, 8
          %s267 = scalar_lea.vmem %s2, %s266
        $region56: #{jsd.1} parent=51 // pred_fallthru
          _
      $region52: #{jsd.1} parent=5 // pred_fallthru
        _
    $region6: #{jsd.1} parent=1 // loop_footer
      %s18 = sadd.s32 1, %s14
    $region7: #{jsd.1} parent=1 // loop_footer_branch
      %13 = sbr.rel target = $region3
    $region8: #{jsd.1} parent=1 // loop_exit
      _
    %268 = vsyncpa [#allocation4], 1
    %s269 = scalar_lea.sflag [#allocation4], 1
    %270 = vsyncpa %s269, 1
    %271 = vsyncpa [#allocation6], 1
    %s272 = scalar_lea.sflag [#allocation6], 1
    %273 = vsyncpa %s272, 1

</llo_original>
